<compile_context>
chip_gen: v6e
topology: v6e:2x2x1
jax: 0.10.0
libtpu: 0.0.40
codegen_flags: <defaults>
</compile_context>

<pallas_src>
import functools

import jax
import jax.numpy as jnp
from jax.experimental import pallas as pl
from jax.experimental.pallas import tpu as pltpu

LN_EPS = 1e-12
_MiB = 1024 * 1024
# Conservative double-buffered VMEM budget: fits v7x's 64 MiB physical VMEM
# with headroom; comfortably inside v5e/v6e's 128 MiB.
_VMEM_BUDGET = 40 * _MiB


def _round_up(x, m):
    return ((x + m - 1) // m) * m


def _as_row(v, h, dtype=jnp.float32):
    return jnp.asarray(v, dtype).reshape(1, h)


def _choose_tm(m, tm_target):
    """Row-tile size: multiple of 8, >=2 tiles when possible (v7x megacore),
    and prefer an exact divisor of m (skips the pad + tail-slice pass)."""
    if m <= 8:
        return _round_up(m, 8)
    tm = min(tm_target, _round_up(m, 8))
    if _round_up(m, tm) // tm < 2:               # ensure >= 2 row tiles
        tm = _round_up((m + 1) // 2, 8)
    if m % tm != 0:                              # prefer a divisor of m
        for cand in range(tm, max(8, tm // 2) - 1, -8):
            if m % cand == 0:
                return cand
    return tm


def _vmem_limit(need_bytes):
    # headroom for compiler scratch; cap below v7x's 64 MiB physical VMEM.
    return int(min(max(need_bytes + 8 * _MiB, 32 * _MiB), 60 * _MiB))


def _layer_norm_f32(y, g, beta, eps, out_dtype):
    # One pass over y: fused mean / mean-of-squares, f32 stats, clamped var.
    mu = jnp.mean(y, axis=-1, keepdims=True)
    msq = jnp.mean(y * y, axis=-1, keepdims=True)
    var = jnp.maximum(msq - mu * mu, 0.0)
    return ((y - mu) * jax.lax.rsqrt(var + eps) * g + beta).astype(out_dtype)


# -------------------- full-K kernel: weight resident in VMEM --------------------
def bert_output_fullk_kernel(x_ref, w_ref, res_ref, b_ref, g_ref, beta_ref,
                             out_ref, *, eps):
    # Cast the activation tile to bf16 right before the MXU (cheap VPU cast,
    # hidden under the matmul); accumulate in f32.
    y = jnp.dot(x_ref[...].astype(jnp.bfloat16), w_ref[...],
                preferred_element_type=jnp.float32)
    # bias + residual, then LayerNorm, all stats in f32.
    # TODO(synk): dropout is identity (inference / eval semantics).
    y = y + b_ref[...] + res_ref[...].astype(jnp.float32)
    out_ref[...] = _layer_norm_f32(y, g_ref[...], beta_ref[...], eps,
                                   out_ref.dtype)


# -------------------- K-tiled fallback kernel (very large I) --------------------
def bert_output_ktiled_kernel(x_ref, w_ref, res_ref, b_ref, g_ref, beta_ref,
                              out_ref, acc_ref, *, eps):
    k = pl.program_id(1)

    @pl.when(k == 0)
    def _():
        acc_ref[...] = jnp.zeros_like(acc_ref)

    acc_ref[...] += jnp.dot(x_ref[...].astype(jnp.bfloat16), w_ref[...],
                            preferred_element_type=jnp.float32)

    @pl.when(k == pl.num_programs(1) - 1)
    def _():
        y = acc_ref[...] + b_ref[...] + res_ref[...].astype(jnp.float32)
        out_ref[...] = _layer_norm_f32(y, g_ref[...], beta_ref[...], eps,
                                       out_ref.dtype)


# -------------------- wrapper --------------------
def bert_output(hidden_states, input_tensor, w, b, gamma, beta, *,
                eps=LN_EPS, tm_target=512, tk_target=512, out_dtype=None,
                _force_ktiled=False):
    """hidden_states: (B, S, I), input_tensor: (B, S, H), w: (I, H),
    b/gamma/beta: (H,) or (1, H)."""
    B, S, I = hidden_states.shape
    H = input_tensor.shape[-1]
    M = B * S
    if out_dtype is None:
        out_dtype = input_tensor.dtype           # model's hidden dtype

    x = hidden_states.reshape(M, I)              # native dtype, no cast pass
    res = input_tensor.reshape(M, H)             # native dtype
    w_bf = w.astype(jnp.bfloat16)                # small param, cast once
    b = _as_row(b, H)
    gamma = _as_row(gamma, H)
    beta = _as_row(beta, H)

    x_b = x.dtype.itemsize
    r_b = res.dtype.itemsize
    o_b = jnp.dtype(out_dtype).itemsize

    # ---- row tile + path selection (resident-W full-K preferred) ----
    tm = _choose_tm(M, tm_target)

    def _fullk_bytes(tm_):
        return (2 * tm_ * I * x_b                # x row tiles (double-buffered)
                + 2 * I * H * 2                  # resident bf16 W (x2 buffers)
                + 2 * tm_ * H * r_b              # residual tiles
                + 2 * tm_ * H * o_b              # output tiles
                + 6 * H * 4)                     # bias / gamma / beta

    use_fullk = (not _force_ktiled) and (2 * I * H * 2 <= _VMEM_BUDGET // 2)
    if use_fullk:
        while tm > 8 and _fullk_bytes(tm) > _VMEM_BUDGET:
            tm = max(8, _round_up(tm // 2, 8))   # shrink rows, keep W resident
        use_fullk = _fullk_bytes(tm) <= _VMEM_BUDGET

    if use_fullk:
        tk, Ip = I, I
    else:
        tk = min(tk_target, _round_up(I, 128))   # lane-dense reduction tile
        Ip = _round_up(I, tk)

    Mp = _round_up(M, tm)
    # TODO(synk): padded rows waste a little LN compute; sliced off below.
    if (Mp, Ip) != (M, I):
        x = jnp.pad(x, ((0, Mp - M), (0, Ip - I)))
    if Mp != M:
        res = jnp.pad(res, ((0, Mp - M), (0, 0)))
    if Ip != I:
        w_bf = jnp.pad(w_bf, ((0, Ip - I), (0, 0)))

    if use_fullk:
        grid = (Mp // tm,)
        kern = functools.partial(bert_output_fullk_kernel, eps=eps)
        out = pl.pallas_call(
            kern,
            out_shape=jax.ShapeDtypeStruct((Mp, H), out_dtype),
            grid=grid,
            in_specs=[
                pl.BlockSpec((tm, Ip), lambda i: (i, 0)),   # x row tile
                pl.BlockSpec((Ip, H), lambda i: (0, 0)),    # resident weight
                pl.BlockSpec((tm, H), lambda i: (i, 0)),    # residual tile
                pl.BlockSpec((1, H), lambda i: (0, 0)),     # bias
                pl.BlockSpec((1, H), lambda i: (0, 0)),     # LN gamma
                pl.BlockSpec((1, H), lambda i: (0, 0)),     # LN beta
            ],
            out_specs=pl.BlockSpec((tm, H), lambda i: (i, 0)),
            compiler_params=pltpu.CompilerParams(
                dimension_semantics=("parallel",),
                vmem_limit_bytes=_vmem_limit(_fullk_bytes(tm)),
            ),
        )(x, w_bf, res, b, gamma, beta)
    else:
        grid = (Mp // tm, Ip // tk)
        need = (2 * tm * tk * x_b + 2 * tk * H * 2 + 2 * tm * H * r_b
                + 2 * tm * H * o_b + tm * H * 4 + 6 * H * 4)
        kern = functools.partial(bert_output_ktiled_kernel, eps=eps)
        out = pl.pallas_call(
            kern,
            out_shape=jax.ShapeDtypeStruct((Mp, H), out_dtype),
            grid=grid,
            in_specs=[
                pl.BlockSpec((tm, tk), lambda i, k: (i, k)),  # x tile
                pl.BlockSpec((tk, H), lambda i, k: (k, 0)),   # W tile
                pl.BlockSpec((tm, H), lambda i, k: (i, 0)),   # residual tile
                pl.BlockSpec((1, H), lambda i, k: (0, 0)),    # bias
                pl.BlockSpec((1, H), lambda i, k: (0, 0)),    # LN gamma
                pl.BlockSpec((1, H), lambda i, k: (0, 0)),    # LN beta
            ],
            out_specs=pl.BlockSpec((tm, H), lambda i, k: (i, 0)),
            scratch_shapes=[pltpu.VMEM((tm, H), jnp.float32)],
            compiler_params=pltpu.CompilerParams(
                dimension_semantics=("parallel", "arbitrary"),
                vmem_limit_bytes=_vmem_limit(need),
            ),
        )(x, w_bf, res, b, gamma, beta)

    if Mp != M:
        out = out[:M]
    return out.reshape(B, S, H)


# -------------------- deterministic parameter init --------------------
def init_params(key, I, H, scale=0.02):
    kw, kb = jax.random.split(key)
    w = scale * jax.random.normal(kw, (I, H), jnp.float32)
    b = scale * jax.random.normal(kb, (1, H), jnp.float32)
    gamma = jnp.ones((1, H), jnp.float32)
    beta = jnp.zeros((1, H), jnp.float32)
    return w, b, gamma, beta


# -------------------- pure-JAX reference (same bf16 operands) --------------------
def bert_output_ref(hidden_states, input_tensor, w, b, gamma, beta, eps=LN_EPS):
    x = hidden_states.astype(jnp.bfloat16).astype(jnp.float32)
    wf = w.astype(jnp.bfloat16).astype(jnp.float32)
    y = x @ wf + b + input_tensor
    mu = jnp.mean(y, axis=-1, keepdims=True)
    var = jnp.mean((y - mu) ** 2, axis=-1, keepdims=True)
    return (y - mu) * jax.lax.rsqrt(var + eps) * gamma + beta


if __name__ == "__main__":
    # config: intermediate_size=64, hidden_size=32, batch=2, seq=8
    B, S, H, INTER = 2, 8, 32, 64

    key = jax.random.PRNGKey(0)
    k1, k2, k3 = jax.random.split(key, 3)

    hidden_states = jax.random.normal(k1, (B, S, INTER), jnp.float32)
    input_tensor = jax.random.normal(k2, (B, S, H), jnp.float32)
    w, b, gamma, beta = init_params(k3, INTER, H)

    ref = bert_output_ref(hidden_states, input_tensor, w, b, gamma, beta)

    # preferred path: resident weight, single (row-tile) grid axis
    out = bert_output(hidden_states, input_tensor, w, b, gamma, beta)
    jax.block_until_ready(out)
    assert out.shape == (B, S, H)
    assert jnp.allclose(out, ref, atol=2e-3, rtol=2e-3)

    # fallback path: K-tiled reduction with VMEM accumulator
    out_kt = bert_output(hidden_states, input_tensor, w, b, gamma, beta,
                         _force_ktiled=True)
    jax.block_until_ready(out_kt)
    assert jnp.allclose(out_kt, ref, atol=2e-3, rtol=2e-3)

    print("KERNEL_OK")
</pallas_src>

<mosaic_0001>
module attributes {stable_mosaic.version = 11 : i64} {
  func.func @bert_output_fullk_kernel(%arg0: i32, %arg1: memref<8x64xf32, #tpu.memory_space<vmem>>, %arg2: memref<64x32xbf16, #tpu.memory_space<vmem>>, %arg3: memref<8x32xf32, #tpu.memory_space<vmem>>, %arg4: memref<1x32xf32, #tpu.memory_space<vmem>>, %arg5: memref<1x32xf32, #tpu.memory_space<vmem>>, %arg6: memref<1x32xf32, #tpu.memory_space<vmem>>, %arg7: memref<8x32xf32, #tpu.memory_space<vmem>>) attributes {dimension_semantics = [#tpu.dimension_semantics<parallel>], iteration_bounds = array<i64: 2>, scalar_prefetch = 0 : i64, scratch_operands = 0 : i64, tpu.core_type = #tpu.core_type<tc>, window_params = [{transform_indices = @transform_0, window_bounds = array<i64: 8, 64>}, {pipeline_mode = #tpu.pipeline_mode<synchronous>, transform_indices = @transform_1, window_bounds = array<i64: 64, 32>}, {transform_indices = @transform_2, window_bounds = array<i64: 8, 32>}, {pipeline_mode = #tpu.pipeline_mode<synchronous>, transform_indices = @transform_3, window_bounds = array<i64: 1, 32>}, {pipeline_mode = #tpu.pipeline_mode<synchronous>, transform_indices = @transform_4, window_bounds = array<i64: 1, 32>}, {pipeline_mode = #tpu.pipeline_mode<synchronous>, transform_indices = @transform_5, window_bounds = array<i64: 1, 32>}, {transform_indices = @transform_6, window_bounds = array<i64: 8, 32>}]} {
    %c0 = arith.constant 0 : index
    %c0_0 = arith.constant 0 : index
    %0 = vector.load %arg1[%c0, %c0_0] : memref<8x64xf32, #tpu.memory_space<vmem>>, vector<8x64xf32>
    %1 = arith.truncf %0 : vector<8x64xf32> to vector<8x64xbf16>
    %c0_1 = arith.constant 0 : index
    %c0_2 = arith.constant 0 : index
    %2 = vector.load %arg2[%c0_1, %c0_2] : memref<64x32xbf16, #tpu.memory_space<vmem>>, vector<64x32xbf16>
    %cst = arith.constant dense<0.000000e+00> : vector<8x32xf32>
    %3 = tpu.matmul %1, %2, %cst {dimension_numbers = #tpu.dot_dimension_numbers<[1], [0], [0], [1], [0, 0, 1, 1], [], []>} : vector<8x64xbf16>, vector<64x32xbf16>, vector<8x32xf32> -> vector<8x32xf32>
    %c0_3 = arith.constant 0 : index
    %c0_4 = arith.constant 0 : index
    %4 = vector.load %arg4[%c0_3, %c0_4] : memref<1x32xf32, #tpu.memory_space<vmem>>, vector<1x32xf32>
    %5 = vector.broadcast %4 : vector<1x32xf32> to vector<8x32xf32>
    %6 = arith.addf %3, %5 : vector<8x32xf32>
    %c0_5 = arith.constant 0 : index
    %c0_6 = arith.constant 0 : index
    %7 = vector.load %arg3[%c0_5, %c0_6] : memref<8x32xf32, #tpu.memory_space<vmem>>, vector<8x32xf32>
    %8 = arith.addf %6, %7 : vector<8x32xf32>
    %c0_7 = arith.constant 0 : index
    %c0_8 = arith.constant 0 : index
    %9 = vector.load %arg5[%c0_7, %c0_8] : memref<1x32xf32, #tpu.memory_space<vmem>>, vector<1x32xf32>
    %c0_9 = arith.constant 0 : index
    %c0_10 = arith.constant 0 : index
    %10 = vector.load %arg6[%c0_9, %c0_10] : memref<1x32xf32, #tpu.memory_space<vmem>>, vector<1x32xf32>
    %cst_11 = arith.constant dense<0.000000e+00> : vector<8xf32>
    %11 = vector.multi_reduction <add>, %8, %cst_11 [1] : vector<8x32xf32> to vector<8xf32>
    %12 = vector.shape_cast %11 : vector<8xf32> to vector<8x1xf32>
    %cst_12 = arith.constant 3.200000e+01 : f32
    %13 = vector.broadcast %cst_12 : f32 to vector<8x1xf32>
    %14 = arith.divf %12, %13 : vector<8x1xf32>
    %15 = arith.mulf %8, %8 : vector<8x32xf32>
    %cst_13 = arith.constant dense<0.000000e+00> : vector<8xf32>
    %16 = vector.multi_reduction <add>, %15, %cst_13 [1] : vector<8x32xf32> to vector<8xf32>
    %17 = vector.shape_cast %16 : vector<8xf32> to vector<8x1xf32>
    %cst_14 = arith.constant 3.200000e+01 : f32
    %18 = vector.broadcast %cst_14 : f32 to vector<8x1xf32>
    %19 = arith.divf %17, %18 : vector<8x1xf32>
    %20 = arith.mulf %14, %14 : vector<8x1xf32>
    %21 = arith.subf %19, %20 : vector<8x1xf32>
    %cst_15 = arith.constant 0.000000e+00 : f32
    %22 = vector.broadcast %cst_15 : f32 to vector<8x1xf32>
    %23 = arith.maximumf %21, %22 : vector<8x1xf32>
    %24 = vector.broadcast %14 : vector<8x1xf32> to vector<8x32xf32>
    %25 = arith.subf %8, %24 : vector<8x32xf32>
    %cst_16 = arith.constant 9.99999996E-13 : f32
    %26 = vector.broadcast %cst_16 : f32 to vector<8x1xf32>
    %27 = arith.addf %23, %26 : vector<8x1xf32>
    %28 = math.rsqrt %27 : vector<8x1xf32>
    %29 = vector.broadcast %28 : vector<8x1xf32> to vector<8x32xf32>
    %30 = arith.mulf %25, %29 : vector<8x32xf32>
    %31 = vector.broadcast %9 : vector<1x32xf32> to vector<8x32xf32>
    %32 = arith.mulf %30, %31 : vector<8x32xf32>
    %33 = vector.broadcast %10 : vector<1x32xf32> to vector<8x32xf32>
    %34 = arith.addf %32, %33 : vector<8x32xf32>
    %c0_17 = arith.constant 0 : index
    %c0_18 = arith.constant 0 : index
    %35 = vector.load %arg7[%c0_17, %c0_18] : memref<8x32xf32, #tpu.memory_space<vmem>>, vector<8x32xf32>
    tpu.vector_store %arg7[%c0_17, %c0_18], %34 {strides = array<i32>} : memref<8x32xf32, #tpu.memory_space<vmem>>, vector<8x32xf32>,
    return
  }
  func.func @transform_0(%arg0: i32) -> (i32, i32) {
    %c0_i32 = arith.constant 0 : i32
    %c0_i32_0 = arith.constant 0 : i32
    return %arg0, %c0_i32 : i32, i32
  }
  func.func @transform_1(%arg0: i32) -> (i32, i32) {
    %c0_i32 = arith.constant 0 : i32
    %c0_i32_0 = arith.constant 0 : i32
    %c0_i32_1 = arith.constant 0 : i32
    return %c0_i32, %c0_i32_0 : i32, i32
  }
  func.func @transform_2(%arg0: i32) -> (i32, i32) {
    %c0_i32 = arith.constant 0 : i32
    %c0_i32_0 = arith.constant 0 : i32
    return %arg0, %c0_i32 : i32, i32
  }
  func.func @transform_3(%arg0: i32) -> (i32, i32) {
    %c0_i32 = arith.constant 0 : i32
    %c0_i32_0 = arith.constant 0 : i32
    %c0_i32_1 = arith.constant 0 : i32
    return %c0_i32, %c0_i32_0 : i32, i32
  }
  func.func @transform_4(%arg0: i32) -> (i32, i32) {
    %c0_i32 = arith.constant 0 : i32
    %c0_i32_0 = arith.constant 0 : i32
    %c0_i32_1 = arith.constant 0 : i32
    return %c0_i32, %c0_i32_0 : i32, i32
  }
  func.func @transform_5(%arg0: i32) -> (i32, i32) {
    %c0_i32 = arith.constant 0 : i32
    %c0_i32_0 = arith.constant 0 : i32
    %c0_i32_1 = arith.constant 0 : i32
    return %c0_i32, %c0_i32_0 : i32, i32
  }
  func.func @transform_6(%arg0: i32) -> (i32, i32) {
    %c0_i32 = arith.constant 0 : i32
    %c0_i32_0 = arith.constant 0 : i32
    return %arg0, %c0_i32 : i32, i32
  }
}

</mosaic_0001>

<llo_original>
// kernel: tpu_custom_call.1
$region0: #{tpu_custom_call.1}
  #allocation0 [shape = 'u32[]', space=smem, size = 0x4, offset = 0x4, fixed_abs, tag = 'smem constant byte address 0x4 - core index']
  #allocation1 [shape = 'u32[144,128]{1,0:T(1,128)}', space=vmem, size = 0x12000, scoped, tag = 'internal scratch']
  %s0 = inlined_call_operand.vmem [shape: f32[16,64], index: 0, kind: input, shape index: {}]
  %s1 = inlined_call_operand.vmem [shape: bf16[64,32], index: 1, kind: input, shape index: {}]
  %s2 = inlined_call_operand.vmem [shape: f32[16,32], index: 2, kind: input, shape index: {}]
  %s3 = inlined_call_operand.vmem [shape: f32[1,32], index: 3, kind: input, shape index: {}]
  %s4 = inlined_call_operand.vmem [shape: f32[1,32], index: 4, kind: input, shape index: {}]
  %s5 = inlined_call_operand.vmem [shape: f32[1,32], index: 5, kind: input, shape index: {}]
  %s6 = inlined_call_operand.hbm [shape: f32[16,32], index: 6, kind: output, shape index: {}]
  %s7 = sld [smem:[#allocation0]]
  $region57: #{tpu_custom_call.1} parent=0
    _
  %s9 = ssub.s32 1, %s7
  %s10 = scalar_select 0, %s9, %s7
  $region1: #{tpu_custom_call.1} parent=0
    #allocation2 [shape = 'u8[8192]{0}', space=vmem, size = 0x2000, scoped, tag = 'output window, operand 0']
    #allocation3 [shape = 's32[2]{0}', space=sflag, size = 0x8, scoped, tag = 'scoped memory for tpu_custom_call.1']
    %11 = vsyncpa [#allocation3], 0
    %s12 = scalar_lea.sflag [#allocation3], 1
    %13 = vsyncpa %s12, 0
    loop: start=0, step=1, limit=4
    $region2: #{tpu_custom_call.1} parent=1 // loop_pre_header
      _
    $region3: #{tpu_custom_call.1} parent=1 // loop_header
      %s15 = sphi 0, %s19
      %p16 = scmp.ge.s32.totalorder %s15, 4
      %s25 = sphi 0, %s27
      %s28 = sphi 0, %s25
      %s29 = sphi 0, %s28
      %s45 = sphi 0, %s29
      %s49 = sphi 0, %s49
      %s51 = sphi 0, %s49
      %s52 = sphi 0, %s51
      %s66 = sphi 0, %s52
      %s72 = sphi 0, %s74
      %s75 = sphi 0, %s72
      %s76 = sphi 0, %s75
      %s92 = sphi 0, %s76
      %s96 = sphi 0, %s96
      %s98 = sphi 0, %s96
      %s99 = sphi 0, %s98
      %s113 = sphi 0, %s99
      %s117 = sphi 0, %s117
      %s119 = sphi 0, %s117
      %s120 = sphi 0, %s119
      %s134 = sphi 0, %s120
      %s138 = sphi 0, %s138
      %s140 = sphi 0, %s138
      %s141 = sphi 0, %s140
      %s155 = sphi 0, %s141
      %s161 = sphi 0, %s163
      %s164 = sphi 0, %s161
      %s165 = sphi 0, %s164
      %s181 = sphi 0, %s165
    $region4: #{tpu_custom_call.1} parent=1 // loop_header_branch
      %18 = sbr.rel (%p16) target = $region8
    $region5: #{tpu_custom_call.1} parent=1 // loop_body
      %s20 = ssub.s32 %s15, 1
      %s21 = ssub.s32 %s15, 2
      %s22 = sadd.s32 %s15, 1
      %s23 = ssub.s32 %s15, %s22
      %p24 = scmp.eq.s32.totalorder %s23, 0
      %s26 = sadd.s32 %s25, 1
      %s27 = scalar_select %p24, %s25, %s26
      %p30 = pneg %p24
      %p31 = scmp.eq.s32.totalorder %s15, 1
      %p32 = por %p30, %p31
      %p33 = scmp.ne.s32.totalorder %s25, %s28
      %p34 = scmp.eq.s32.totalorder %s15, 0
      %p35 = por %p33, %p34
      %p36 = scmp.ne.s32.totalorder %s25, %s28
      %p37 = scmp.eq.s32.totalorder %s20, 1
      %p38 = por %p36, %p37
      %p39 = scmp.ne.s32.totalorder %s28, %s29
      %p40 = scmp.eq.s32.totalorder %s20, 0
      %p41 = por %p39, %p40
      %p42 = scmp.ne.s32.totalorder %s28, %s29
      %p43 = scmp.eq.s32.totalorder %s21, 1
      %p44 = por %p42, %p43
      %p46 = scmp.ne.s32.totalorder %s29, %s45
      %p47 = scmp.eq.s32.totalorder %s21, 0
      %p48 = por %p46, %p47
      %s50 = sadd.s32 %s49, 1
      %p53 = scmp.eq.s32.totalorder %s15, 1
      %p54 = scmp.ne.s32.totalorder %s49, %s51
      %p55 = scmp.eq.s32.totalorder %s15, 0
      %p56 = por %p54, %p55
      %p57 = scmp.ne.s32.totalorder %s49, %s51
      %p58 = scmp.eq.s32.totalorder %s20, 1
      %p59 = por %p57, %p58
      %p60 = scmp.ne.s32.totalorder %s51, %s52
      %p61 = scmp.eq.s32.totalorder %s20, 0
      %p62 = por %p60, %p61
      %p63 = scmp.ne.s32.totalorder %s51, %s52
      %p64 = scmp.eq.s32.totalorder %s21, 1
      %p65 = por %p63, %p64
      %p67 = scmp.ne.s32.totalorder %s52, %s66
      %p68 = scmp.eq.s32.totalorder %s21, 0
      %p69 = por %p67, %p68
      %s70 = ssub.s32 %s15, %s22
      %p71 = scmp.eq.s32.totalorder %s70, 0
      %s73 = sadd.s32 %s72, 1
      %s74 = scalar_select %p71, %s72, %s73
      %p77 = pneg %p71
      %p78 = scmp.eq.s32.totalorder %s15, 1
      %p79 = por %p77, %p78
      %p80 = scmp.ne.s32.totalorder %s72, %s75
      %p81 = scmp.eq.s32.totalorder %s15, 0
      %p82 = por %p80, %p81
      %p83 = scmp.ne.s32.totalorder %s72, %s75
      %p84 = scmp.eq.s32.totalorder %s20, 1
      %p85 = por %p83, %p84
      %p86 = scmp.ne.s32.totalorder %s75, %s76
      %p87 = scmp.eq.s32.totalorder %s20, 0
      %p88 = por %p86, %p87
      %p89 = scmp.ne.s32.totalorder %s75, %s76
      %p90 = scmp.eq.s32.totalorder %s21, 1
      %p91 = por %p89, %p90
      %p93 = scmp.ne.s32.totalorder %s76, %s92
      %p94 = scmp.eq.s32.totalorder %s21, 0
      %p95 = por %p93, %p94
      %s97 = sadd.s32 %s96, 1
      %p100 = scmp.eq.s32.totalorder %s15, 1
      %p101 = scmp.ne.s32.totalorder %s96, %s98
      %p102 = scmp.eq.s32.totalorder %s15, 0
      %p103 = por %p101, %p102
      %p104 = scmp.ne.s32.totalorder %s96, %s98
      %p105 = scmp.eq.s32.totalorder %s20, 1
      %p106 = por %p104, %p105
      %p107 = scmp.ne.s32.totalorder %s98, %s99
      %p108 = scmp.eq.s32.totalorder %s20, 0
      %p109 = por %p107, %p108
      %p110 = scmp.ne.s32.totalorder %s98, %s99
      %p111 = scmp.eq.s32.totalorder %s21, 1
      %p112 = por %p110, %p111
      %p114 = scmp.ne.s32.totalorder %s99, %s113
      %p115 = scmp.eq.s32.totalorder %s21, 0
      %p116 = por %p114, %p115
      %s118 = sadd.s32 %s117, 1
      %p121 = scmp.eq.s32.totalorder %s15, 1
      %p122 = scmp.ne.s32.totalorder %s117, %s119
      %p123 = scmp.eq.s32.totalorder %s15, 0
      %p124 = por %p122, %p123
      %p125 = scmp.ne.s32.totalorder %s117, %s119
      %p126 = scmp.eq.s32.totalorder %s20, 1
      %p127 = por %p125, %p126
      %p128 = scmp.ne.s32.totalorder %s119, %s120
      %p129 = scmp.eq.s32.totalorder %s20, 0
      %p130 = por %p128, %p129
      %p131 = scmp.ne.s32.totalorder %s119, %s120
      %p132 = scmp.eq.s32.totalorder %s21, 1
      %p133 = por %p131, %p132
      %p135 = scmp.ne.s32.totalorder %s120, %s134
      %p136 = scmp.eq.s32.totalorder %s21, 0
      %p137 = por %p135, %p136
      %s139 = sadd.s32 %s138, 1
      %p142 = scmp.eq.s32.totalorder %s15, 1
      %p143 = scmp.ne.s32.totalorder %s138, %s140
      %p144 = scmp.eq.s32.totalorder %s15, 0
      %p145 = por %p143, %p144
      %p146 = scmp.ne.s32.totalorder %s138, %s140
      %p147 = scmp.eq.s32.totalorder %s20, 1
      %p148 = por %p146, %p147
      %p149 = scmp.ne.s32.totalorder %s140, %s141
      %p150 = scmp.eq.s32.totalorder %s20, 0
      %p151 = por %p149, %p150
      %p152 = scmp.ne.s32.totalorder %s140, %s141
      %p153 = scmp.eq.s32.totalorder %s21, 1
      %p154 = por %p152, %p153
      %p156 = scmp.ne.s32.totalorder %s141, %s155
      %p157 = scmp.eq.s32.totalorder %s21, 0
      %p158 = por %p156, %p157
      %s159 = ssub.s32 %s15, %s22
      %p160 = scmp.eq.s32.totalorder %s159, 0
      %s162 = sadd.s32 %s161, 1
      %s163 = scalar_select %p160, %s161, %s162
      %p166 = pneg %p160
      %p167 = scmp.eq.s32.totalorder %s15, 1
      %p168 = por %p166, %p167
      %p169 = scmp.ne.s32.totalorder %s161, %s164
      %p170 = scmp.eq.s32.totalorder %s15, 0
      %p171 = por %p169, %p170
      %p172 = scmp.ne.s32.totalorder %s161, %s164
      %p173 = scmp.eq.s32.totalorder %s20, 1
      %p174 = por %p172, %p173
      %p175 = scmp.ne.s32.totalorder %s164, %s165
      %p176 = scmp.eq.s32.totalorder %s20, 0
      %p177 = por %p175, %p176
      %p178 = scmp.ne.s32.totalorder %s164, %s165
      %p179 = scmp.eq.s32.totalorder %s21, 1
      %p180 = por %p178, %p179
      %p182 = scmp.ne.s32.totalorder %s165, %s181
      %p183 = scmp.eq.s32.totalorder %s21, 0
      %p184 = por %p182, %p183
      %p185 = scmp.le.s32.totalorder 1, %s15
      %p186 = scmp.lt.s32.totalorder %s15, 3
      %p187 = pnand %p185, %p186
      %p188 = pneg %p187
      // Predicated region
      $region9: #{tpu_custom_call.1} parent=5 // pred_check
        _
      $region10: #{tpu_custom_call.1} parent=5 // pred_check_branch
        %190 = sbr.rel (%p187) target = $region12
      $region11: #{tpu_custom_call.1} parent=5 // pred_region
        %s191 = ssub.s32 %s15, 1
        // Predicated region
        $region13: #{tpu_custom_call.1} parent=11 // pred_check
          %p192 = pneg %p62
        $region14: #{tpu_custom_call.1} parent=11 // pred_check_branch
          %194 = sbr.rel (%p192) target = $region16
        $region15: #{tpu_custom_call.1} parent=11 // pred_region
          _
        $region16: #{tpu_custom_call.1} parent=11 // pred_fallthru
          _
        // Predicated region
        $region17: #{tpu_custom_call.1} parent=11 // pred_check
          %p195 = pneg %p109
        $region18: #{tpu_custom_call.1} parent=11 // pred_check_branch
          %197 = sbr.rel (%p195) target = $region20
        $region19: #{tpu_custom_call.1} parent=11 // pred_region
          _
        $region20: #{tpu_custom_call.1} parent=11 // pred_fallthru
          _
        // Predicated region
        $region21: #{tpu_custom_call.1} parent=11 // pred_check
          %p198 = pneg %p130
        $region22: #{tpu_custom_call.1} parent=11 // pred_check_branch
          %200 = sbr.rel (%p198) target = $region24
        $region23: #{tpu_custom_call.1} parent=11 // pred_region
          _
        $region24: #{tpu_custom_call.1} parent=11 // pred_fallthru
          _
        // Predicated region
        $region25: #{tpu_custom_call.1} parent=11 // pred_check
          %p201 = pneg %p151
        $region26: #{tpu_custom_call.1} parent=11 // pred_check_branch
          %203 = sbr.rel (%p201) target = $region28
        $region27: #{tpu_custom_call.1} parent=11 // pred_region
          _
        $region28: #{tpu_custom_call.1} parent=11 // pred_fallthru
          _
      $region12: #{tpu_custom_call.1} parent=5 // pred_fallthru
        _
      %p204 = scmp.lt.s32.totalorder %s15, 2
      // Predicated region
      $region29: #{tpu_custom_call.1} parent=5 // pred_check
        %p205 = pneg %p204
      $region30: #{tpu_custom_call.1} parent=5 // pred_check_branch
        %207 = sbr.rel (%p205) target = $region32
      $region31: #{tpu_custom_call.1} parent=5 // pred_region
        // Predicated region
        $region33: #{tpu_custom_call.1} parent=31 // pred_check
          %p208 = pneg %p35
        $region34: #{tpu_custom_call.1} parent=31 // pred_check_branch
          %210 = sbr.rel (%p208) target = $region36
        $region35: #{tpu_custom_call.1} parent=31 // pred_region
          %p211 = scmp.lt.s32.totalorder %s15, 1
          %s212 = scalar_select %p211, %s15, 1
          %s213 = smul.addr %s212, 8
          %s214 = scalar_lea.vmem %s0, %s213
        $region36: #{tpu_custom_call.1} parent=31 // pred_fallthru
          _
        // Predicated region
        $region37: #{tpu_custom_call.1} parent=31 // pred_check
          %p215 = pneg %p82
        $region38: #{tpu_custom_call.1} parent=31 // pred_check_branch
          %217 = sbr.rel (%p215) target = $region40
        $region39: #{tpu_custom_call.1} parent=31 // pred_region
          %p218 = scmp.lt.s32.totalorder %s15, 1
          %s219 = scalar_select %p218, %s15, 1
          %s220 = smul.addr %s219, 8
          %s221 = scalar_lea.vmem %s2, %s220
        $region40: #{tpu_custom_call.1} parent=31 // pred_fallthru
          _
      $region32: #{tpu_custom_call.1} parent=5 // pred_fallthru
        _
      %p222 = scmp.le.s32.totalorder 1, %s15
      %p223 = scmp.lt.s32.totalorder %s15, 3
      %p224 = pnand %p222, %p223
      %p225 = pneg %p224
      // Predicated region
      $region41: #{tpu_custom_call.1} parent=5 // pred_check
        _
      $region42: #{tpu_custom_call.1} parent=5 // pred_check_branch
        %227 = sbr.rel (%p224) target = $region44
      $region43: #{tpu_custom_call.1} parent=5 // pred_region
        %s228 = ssub.s32 %s15, 1
        %p229 = scmp.lt.s32.totalorder %s20, 1
        %s230 = scalar_select %p229, %s20, 1
        %s231 = smul.addr %s230, 8
        %s232 = scalar_lea.vmem %s0, %s231
        %p233 = pneg %p41
        %p234 = pneg %p38
        %p235 = pneg %p62
        %p236 = pneg %p59
        %p237 = scmp.lt.s32.totalorder %s20, 1
        %s238 = scalar_select %p237, %s20, 1
        %s239 = smul.addr %s238, 8
        %s240 = scalar_lea.vmem %s2, %s239
        %p241 = pneg %p88
        %p242 = pneg %p85
        %p243 = pneg %p109
        %p244 = pneg %p106
        %p245 = pneg %p130
        %p246 = pneg %p127
        %p247 = pneg %p151
        %p248 = pneg %p148
        %p249 = pneg %p177
        %p250 = pneg %p174
        %s251 = sand.u32 %s164, 1
        %s252 = scalar_lea.sflag [#allocation3], %s251
        %s253 = sand.u32 %s164, 1
        %s254 = smul.addr %s253, 8
        %s255 = scalar_lea.vmem [#allocation2], %s254
        %p256 = scmp.lt.s32.totalorder %s20, 1
        %s257 = scalar_select %p256, %s20, 1
        %s258 = smul.addr %s257, 8
        %s259 = scalar_lea.vmem %s0, %s258
        %p260 = scmp.lt.s32.totalorder %s20, 1
        %s261 = scalar_select %p260, %s20, 1
        %s262 = smul.addr %s261, 8
        %s263 = scalar_lea.vmem %s2, %s262
        %v265 = vld [vmem:[%s259] sm:$0xff]
        %v266 = vpack.c.bf16 %v265, %v265
        %v267 = vld [vmem:[%s1] sm:$0xf]
        %v268 = vld [vmem:[%s1 + $0x4] sm:$0xf]
        %v269 = vld [vmem:[%s1 + $0x8] sm:$0xf]
        %v270 = vld [vmem:[%s1 + $0xc] sm:$0xf]
        %v271 = vld [vmem:[%s1 + $0x10] sm:$0xf]
        %v272 = vld [vmem:[%s1 + $0x14] sm:$0xf]
        %v273 = vld [vmem:[%s1 + $0x18] sm:$0xf]
        %v274 = vld [vmem:[%s1 + $0x1c] sm:$0xf]
        %v275 = vld [vmem:[%s3] sm:$0x1]
        %v277 = vlaneseq
        %v278 = vshrl.u32 %v277, 7
        %v279 = vsub.s32 0, %v278
        %v280 = vrot.slane %v275, %v279
        %v290 = vunpack.c.l.b16 %v267
        %v291 = vunpack.c.l.b16 %v268
        %v292 = vunpack.c.l.b16 %v269
        %v293 = vunpack.c.l.b16 %v270
        %v294 = vunpack.c.l.b16 %v271
        %v295 = vunpack.c.l.b16 %v272
        %v296 = vunpack.c.l.b16 %v273
        %v297 = vunpack.c.l.b16 %v274
        %v298 = vpack.c.b16 %v291, %v290
        %v299 = vpack.c.b16 %v293, %v292
        %v300 = vpack.c.b16 %v295, %v294
        %v301 = vpack.c.b16 %v297, %v296
        %vm306 = vcmask 523264
        %v308 = vsel %vm306, %v266, 0
        %310 = vmatprep.subr.bf16.mxu0 0
        %311 = vmatpush1.bf16.msra.mxu0 0
        %312 = vmatprep.subr.bf16.mxu0 0
        %313 = vmatpush1.bf16.msra.mxu0 0
        %314 = vmatprep.subr.bf16.mxu0 0
        %315 = vmatpush1.bf16.msra.mxu0 0
        %316 = vmatprep.subr.bf16.mxu0 0
        %317 = vmatpush1.bf16.msra.mxu0 0
        %318 = vmatprep.subr.bf16.mxu0 0
        %319 = vmatpush1.bf16.msra.mxu0 %v301
        %320 = vmatprep.subr.bf16.mxu0 0
        %321 = vmatpush1.bf16.msra.mxu0 %v300
        %322 = vmatprep.subr.bf16.mxu0 0
        %323 = vmatpush1.bf16.msra.mxu0 %v299
        %324 = vmatprep.subr.bf16.mxu0 0
        %325 = vmatpush1.bf16.msra.mxu0 %v298
        %326 = vmatprep.subr.bf16.mxu0 0
        %327 = vmatpush2.bf16.msra.mxu0 0
        %328 = vmatprep.subr.bf16.mxu0 0
        %329 = vmatpush2.bf16.msra.mxu0 0
        %330 = vmatprep.subr.bf16.mxu0 0
        %331 = vmatpush2.bf16.msra.mxu0 0
        %332 = vmatprep.subr.bf16.mxu0 0
        %333 = vmatpush2.bf16.msra.mxu0 0
        %334 = vmatprep.subr.bf16.mxu0 0
        %335 = vmatpush2.bf16.msra.mxu0 0
        %336 = vmatprep.subr.bf16.mxu0 0
        %337 = vmatpush2.bf16.msra.mxu0 0
        %338 = vmatprep.subr.bf16.mxu0 0
        %339 = vmatpush2.bf16.msra.mxu0 0
        %340 = vmatprep.subr.bf16.mxu0 0
        %341 = vmatpush2.bf16.msra.mxu0 0
        %342 = vmatprep.mubr.bf16.mxu0 0
        %343 = vmatmul.mubr.bf16.gmra.mxu0 %v308
        %v344 = vpop.f32.mrf.mxu0
        %v345 = vadd.f32 %v280, %v344
        %v346 = vpop.f32.mrf.mxu0
        %v347 = vpop.f32.mrf.mxu0
        %v348 = vpop.f32.mrf.mxu0
        %349 = vdwg.mxu0
        %v350 = vld [vmem:[%s263] sm:$0xff]
        %v351 = vadd.f32 %v345, %v350
        %v352 = vld [vmem:[%s4] sm:$0x1]
        %v353 = vld [vmem:[%s5] sm:$0x1]
        %vm354 = vcmask 261120
        %v355 = vsel %vm354, %v351, 0.0
        %356 = vadd.xlane.f32.xlu0 %v355
        %v357 = vpop.xlane.xlu0 %356
        %v358 = vrcp.pop 32.0
        %v359 = vmul.f32 %v357, %v358
        %v360 = vmul.f32 %v351, %v351
        %v361 = vsel %vm354, %v360, 0.0
        %362 = vadd.xlane.f32.xlu0 %v361
        %v363 = vpop.xlane.xlu0 %362
        %v364 = vmul.f32 %v363, %v358
        %v365 = vmul.f32 %v359, %v359
        %v366 = vsub.f32 %v364, %v365
        %v367 = vmax.f32 %v366, 0.0
        %v368 = vsub.f32 %v351, %v359
        %v369 = vadd.f32 %v367, 1e-12
        %v370 = vrsqrt.pop %v369
        %v371 = vmul.f32 %v368, %v370
        %v373 = vlaneseq
        %v374 = vshrl.u32 %v373, 7
        %v375 = vsub.s32 0, %v374
        %v376 = vrot.slane %v352, %v375
        %v378 = vmul.f32 %v371, %v376
        %v380 = vlaneseq
        %v381 = vshrl.u32 %v380, 7
        %v382 = vsub.s32 0, %v381
        %v383 = vrot.slane %v353, %v382
        %v385 = vadd.f32 %v378, %v383
        %386 = vst.msk [vmem:[%s255] sm:$0xff] %vm354, %v385
        %s387 = sand.u32 %s164, 1
        %s388 = scalar_lea.sflag [#allocation3], %s387
        %s389 = sand.u32 %s164, 1
        %s390 = smul.addr %s389, 8
        %s391 = scalar_lea.vmem [#allocation2], %s390
        // Predicated region
        $region45: #{tpu_custom_call.1} parent=43 // pred_check
          %p392 = pneg %p174
        $region46: #{tpu_custom_call.1} parent=43 // pred_check_branch
          %394 = sbr.rel (%p392) target = $region48
        $region47: #{tpu_custom_call.1} parent=43 // pred_region
          %s396 = ssub.s32 128, 128
          %397 = vsyncadd %s388, %s396
          %s398 = smul.addr %s20, 128
          %s399 = scalar_lea.hbm %s6, %s398
          %s401 = sshll.u32 %s391, 4
          %s402 = int_to_ptr.vmem [resolvable:$true] %s401
          %404 = dma.vmem_to_hbm [thread:$0]  %s402, 128, %s399, %s388
        $region48: #{tpu_custom_call.1} parent=43 // pred_fallthru
          _
      $region44: #{tpu_custom_call.1} parent=5 // pred_fallthru
        _
      %p405 = scmp.le.s32.totalorder 2, %s15
      // Predicated region
      $region49: #{tpu_custom_call.1} parent=5 // pred_check
        %p406 = pneg %p405
      $region50: #{tpu_custom_call.1} parent=5 // pred_check_branch
        %408 = sbr.rel (%p406) target = $region52
      $region51: #{tpu_custom_call.1} parent=5 // pred_region
        %s409 = ssub.s32 %s15, 2
        // Predicated region
        $region53: #{tpu_custom_call.1} parent=51 // pred_check
          %p410 = pneg %p180
        $region54: #{tpu_custom_call.1} parent=51 // pred_check_branch
          %412 = sbr.rel (%p410) target = $region56
        $region55: #{tpu_custom_call.1} parent=51 // pred_region
          %s413 = sand.u32 %s165, 1
          %s414 = scalar_lea.sflag [#allocation3], %s413
          %s415 = sand.u32 %s165, 1
          %s416 = smul.addr %s415, 8
          %s417 = scalar_lea.vmem [#allocation2], %s416
          %418 = dma.done %s414, 128
        $region56: #{tpu_custom_call.1} parent=51 // pred_fallthru
          _
      $region52: #{tpu_custom_call.1} parent=5 // pred_fallthru
        _
    $region6: #{tpu_custom_call.1} parent=1 // loop_footer
      %s19 = sadd.s32 1, %s15
    $region7: #{tpu_custom_call.1} parent=1 // loop_footer_branch
      %14 = sbr.rel target = $region3
    $region8: #{tpu_custom_call.1} parent=1 // loop_exit
      _
    %419 = vsyncpa [#allocation3], 1
    %s420 = scalar_lea.sflag [#allocation3], 1
    %421 = vsyncpa %s420, 1

</llo_original>
